<compile_context>
chip_gen: v7x
topology: tpu7x:2x2x1
jax: 0.10.0
libtpu: 0.0.40
codegen_flags: <defaults>
</compile_context>

<pallas_src>
import functools

import jax
import jax.numpy as jnp
from jax.experimental import pallas as pl
from jax.experimental.pallas import tpu as pltpu

LN_EPS = 1e-5  # PyTorch nn.LayerNorm default


def _round_up(x, m):
    return ((x + m - 1) // m) * m


def _vmem_limit_bytes():
    """Per-generation VMEM budget: ~110 MiB on v5e/v6e, ~56 MiB on v7x."""
    cap = None
    try:
        cap = int(pltpu.get_tpu_info().vmem_capacity_bytes)
    except Exception:
        cap = None
    if not cap or cap < 32 * 1024 * 1024:
        cap = 64 * 1024 * 1024  # conservative fallback (v7x per-TensorCore VMEM)
    return int(min(cap - 8 * 1024 * 1024, 110 * 1024 * 1024))


def _fits(tile_m, tile_f, dp, x_bytes, w_bytes, budget):
    """Rough per-step VMEM footprint (double-buffered streams + scratch)."""
    need = (2 * tile_m * dp * x_bytes        # x tile (2 pipeline buffers)
            + 2 * dp * tile_f * w_bytes      # w1 slab
            + 2 * tile_f * dp * w_bytes      # w2 slab
            + 2 * tile_m * dp * x_bytes      # output tile
            + tile_m * dp * 4                # f32 accumulator scratch
            + 2 * 2 * dp * max(w_bytes, 4))  # [gamma; beta]
    return need <= budget


def ffn_kernel(x_ref, w1_ref, w2_ref, gb_ref, o_ref, acc_ref, *,
               d_model_true, mxu_dtype):
    # Grid = (M tiles ["parallel"], d_ff chunks ["arbitrary", last]).
    #   x_ref:  (tile_m, Dp)      resident across the k axis (constant block index)
    #   w1_ref: (Dp, tile_f)      fc1.weight.T slab, streamed over k
    #   w2_ref: (tile_f, Dp)      fc2.weight.T slab, streamed over k
    #   gb_ref: (2, Dp)           row 0 = gamma, row 1 = beta (resident)
    #   o_ref:  (tile_m, Dp)      written only on the last k step
    #   acc_ref:(tile_m, Dp) f32  accumulator scratch
    k = pl.program_id(1)

    @pl.when(k == 0)
    def _init():
        acc_ref[...] = jnp.zeros_like(acc_ref)

    x = x_ref[...]
    xm = x if mxu_dtype is None else x.astype(mxu_dtype)

    # fc1 slab -> ReLU -> fc2 slab, accumulated in f32.  ReLU is elementwise, so
    # chunking the hidden (d_ff) axis is exact.
    h = jnp.dot(xm, w1_ref[...], preferred_element_type=jnp.float32)
    h = jnp.maximum(h, 0.0)
    acc_ref[...] += jnp.dot(h.astype(w2_ref.dtype), w2_ref[...],
                            preferred_element_type=jnp.float32)

    @pl.when(k == pl.num_programs(1) - 1)
    def _finalize():
        # Residual add in f32.  Padded feature columns of x / w1 / w2 / gamma / beta
        # are zero, so padded columns of y are exactly zero and the LayerNorm sums
        # over the padded width are correct when dividing by the TRUE d_model.
        y = acc_ref[...] + x.astype(jnp.float32)
        inv_d = jnp.float32(1.0 / d_model_true)
        s1 = jnp.sum(y, axis=-1, keepdims=True)
        s2 = jnp.sum(y * y, axis=-1, keepdims=True)
        mean = s1 * inv_d
        var = jnp.maximum(s2 * inv_d - mean * mean, 0.0)  # clamp cancellation
        inv = jax.lax.rsqrt(var + LN_EPS)
        gb = gb_ref[...].astype(jnp.float32)
        gamma = gb[0:1, :]
        beta = gb[1:2, :]
        o_ref[...] = ((y - mean) * inv * gamma + beta).astype(o_ref.dtype)


def make_poswise_ffn(w1_t, w2_t, gamma, beta, *, tile_m=None, tile_f=None,
                     mxu_dtype=None):
    """Pads / lays out the static parameters ONCE and returns a jitted f(x)->out.

    w1_t: [d_model, d_ff]  (= fc1.weight.T)     w2_t: [d_ff, d_model] (= fc2.weight.T)
    gamma, beta: [d_model]                      mxu_dtype: optional bf16 for the MXU
    """
    d_model, d_ff = w1_t.shape
    assert w2_t.shape == (d_ff, d_model)

    dp = _round_up(d_model, 128)
    w_dtype = jnp.dtype(mxu_dtype) if mxu_dtype is not None else jnp.dtype(w1_t.dtype)
    w_bytes = w_dtype.itemsize

    vmem_limit = _vmem_limit_bytes()
    budget = int(vmem_limit * 0.8)

    # d_ff chunk size: multiple of 128, <= 512 by default, shrunk until the worst-case
    # (tile_m = 256) footprint fits the per-generation VMEM budget.
    tf = tile_f if tile_f is not None else min(_round_up(d_ff, 128), 512)
    tf = max(128, _round_up(tf, 128))
    while tf > 128 and not _fits(256, tf, dp, 4, w_bytes, budget):
        tf = max(128, (tf // 2) // 128 * 128)
    fp = _round_up(d_ff, tf)
    num_k = fp // tf

    # One-time weight / affine-param padding (zero pad -> exact results).
    w1p = w1_t if (dp == d_model and fp == d_ff) else jnp.pad(
        w1_t, ((0, dp - d_model), (0, fp - d_ff)))
    w2p = w2_t if (dp == d_model and fp == d_ff) else jnp.pad(
        w2_t, ((0, fp - d_ff), (0, dp - d_model)))
    if mxu_dtype is not None:
        w1p = w1p.astype(mxu_dtype)
        w2p = w2p.astype(mxu_dtype)
    gb = jnp.stack([gamma, beta], axis=0)
    if dp != d_model:
        gb = jnp.pad(gb, ((0, 0), (0, dp - d_model)))

    def _pick_tile_m(m, x_bytes):
        if tile_m is not None:
            tm = max(8, _round_up(tile_m, 8))
        elif m >= 1024:
            tm = 256                                # MXU-native row group (v6e/v7x)
        elif m >= 16:
            tm = max(8, _round_up((m + 1) // 2, 8))  # >= 2 grid steps (2 TCs / pipeline)
        else:
            tm = max(8, _round_up(m, 8))
        while tm > 64 and not _fits(tm, tf, dp, x_bytes, w_bytes, budget):
            tm = max(64, _round_up(tm // 2, 8))
        return tm

    kernel = functools.partial(ffn_kernel, d_model_true=d_model, mxu_dtype=mxu_dtype)

    @jax.jit
    def ffn(x):
        b, s, dm = x.shape
        assert dm == d_model
        m = b * s
        x2d = x.reshape(m, d_model)
        if dp != d_model:
            x2d = jnp.pad(x2d, ((0, 0), (0, dp - d_model)))
        tm = _pick_tile_m(m, jnp.dtype(x.dtype).itemsize)
        grid = (pl.cdiv(m, tm), num_k)   # no M padding: ragged tail handled by Pallas

        out2d = pl.pallas_call(
            kernel,
            out_shape=jax.ShapeDtypeStruct((m, dp), x.dtype),
            grid_spec=pltpu.PrefetchScalarGridSpec(
                num_scalar_prefetch=0,
                grid=grid,
                in_specs=[
                    pl.BlockSpec((tm, dp), lambda i, k: (i, 0)),      # x: resident over k
                    pl.BlockSpec((dp, tf), lambda i, k: (0, k)),      # w1 slab: streamed
                    pl.BlockSpec((tf, dp), lambda i, k: (k, 0)),      # w2 slab: streamed
                    pl.BlockSpec((2, dp), lambda i, k: (0, 0)),       # [gamma; beta]
                ],
                out_specs=pl.BlockSpec((tm, dp), lambda i, k: (i, 0)),
                scratch_shapes=[pltpu.VMEM((tm, dp), jnp.float32)],
            ),
            compiler_params=pltpu.CompilerParams(
                dimension_semantics=("parallel", "arbitrary"),
                vmem_limit_bytes=vmem_limit,
            ),
        )(x2d, w1p, w2p, gb)

        return out2d[:, :d_model].reshape(b, s, d_model)

    return ffn


def reference_ffn(x, w1_t, w2_t, gamma, beta):
    h = jnp.maximum(x @ w1_t, 0.0)
    y = h @ w2_t + x
    mean = jnp.mean(y, axis=-1, keepdims=True)
    var = jnp.mean((y - mean) ** 2, axis=-1, keepdims=True)
    return (y - mean) * jax.lax.rsqrt(var + LN_EPS) * gamma + beta


if __name__ == "__main__":
    # Small shapes implied by the module: x is [batch, seq, d_model].
    batch, seq, d_model, d_ff = 2, 8, 32, 64

    key = jax.random.PRNGKey(0)
    kx, k1, k2, kg, kb = jax.random.split(key, 5)

    x = jax.random.normal(kx, (batch, seq, d_model), dtype=jnp.float32)
    # fc1.weight has shape (d_ff, d_model); we pass its transpose.
    w1_t = (jax.random.normal(k1, (d_model, d_ff), dtype=jnp.float32)
            * (1.0 / jnp.sqrt(jnp.float32(d_model))))
    # fc2.weight has shape (d_model, d_ff); we pass its transpose.
    w2_t = (jax.random.normal(k2, (d_ff, d_model), dtype=jnp.float32)
            * (1.0 / jnp.sqrt(jnp.float32(d_ff))))
    gamma = 1.0 + 0.1 * jax.random.normal(kg, (d_model,), dtype=jnp.float32)
    beta = 0.1 * jax.random.normal(kb, (d_model,), dtype=jnp.float32)

    # Parameters are padded / laid out once; the returned fn is reused per call.
    ffn = make_poswise_ffn(w1_t, w2_t, gamma, beta)
    out = ffn(x)
    jax.block_until_ready(out)

    ref = reference_ffn(x, w1_t, w2_t, gamma, beta)
    assert out.shape == (batch, seq, d_model)
    assert jnp.allclose(out, ref, atol=2e-4, rtol=2e-4), float(jnp.max(jnp.abs(out - ref)))

    print("KERNEL_OK")
</pallas_src>

<mosaic_0001>
module attributes {stable_mosaic.version = 11 : i64} {
  func.func @ffn_kernel(%arg0: i32, %arg1: i32, %arg2: memref<8x128xf32, #tpu.memory_space<vmem>>, %arg3: memref<128x128xf32, #tpu.memory_space<vmem>>, %arg4: memref<128x128xf32, #tpu.memory_space<vmem>>, %arg5: memref<2x128xf32, #tpu.memory_space<vmem>>, %arg6: memref<8x128xf32, #tpu.memory_space<vmem>>, %arg7: memref<8x128xf32, #tpu.memory_space<vmem>>) attributes {dimension_semantics = [#tpu.dimension_semantics<parallel>, #tpu.dimension_semantics<arbitrary>], iteration_bounds = array<i64: 2, 1>, scalar_prefetch = 0 : i64, scratch_operands = 1 : i64, tpu.core_type = #tpu.core_type<tc>, window_params = [{transform_indices = @transform_0, window_bounds = array<i64: 8, 128>}, {transform_indices = @transform_1, window_bounds = array<i64: 128, 128>}, {transform_indices = @transform_2, window_bounds = array<i64: 128, 128>}, {pipeline_mode = #tpu.pipeline_mode<synchronous>, transform_indices = @transform_3, window_bounds = array<i64: 2, 128>}, {transform_indices = @transform_4, window_bounds = array<i64: 8, 128>}]} {
    %c0_i32 = arith.constant 0 : i32
    %0 = arith.cmpi eq, %arg1, %c0_i32 : i32
    %1 = arith.extui %0 : i1 to i32
    %c0_i32_0 = arith.constant 0 : i32
    %2 = arith.cmpi ne, %1, %c0_i32_0 : i32
    scf.if %2 {
      %cst_14 = arith.constant 0.000000e+00 : f32
      %16 = vector.broadcast %cst_14 : f32 to vector<8x128xf32>
      %c0_15 = arith.constant 0 : index
      %c0_16 = arith.constant 0 : index
      %17 = vector.load %arg7[%c0_15, %c0_16] : memref<8x128xf32, #tpu.memory_space<vmem>>, vector<8x128xf32>
      tpu.vector_store %arg7[%c0_15, %c0_16], %16 {strides = array<i32>} : memref<8x128xf32, #tpu.memory_space<vmem>>, vector<8x128xf32>,
    } else {
    }
    %c0 = arith.constant 0 : index
    %c0_1 = arith.constant 0 : index
    %3 = vector.load %arg2[%c0, %c0_1] : memref<8x128xf32, #tpu.memory_space<vmem>>, vector<8x128xf32>
    %c0_2 = arith.constant 0 : index
    %c0_3 = arith.constant 0 : index
    %4 = vector.load %arg3[%c0_2, %c0_3] : memref<128x128xf32, #tpu.memory_space<vmem>>, vector<128x128xf32>
    %cst = arith.constant dense<0.000000e+00> : vector<8x128xf32>
    %5 = tpu.matmul %3, %4, %cst {dimension_numbers = #tpu.dot_dimension_numbers<[1], [0], [0], [1], [0, 0, 1, 1], [], []>} : vector<8x128xf32>, vector<128x128xf32>, vector<8x128xf32> -> vector<8x128xf32>
    %cst_4 = arith.constant 0.000000e+00 : f32
    %6 = vector.broadcast %cst_4 : f32 to vector<8x128xf32>
    %7 = arith.maximumf %5, %6 : vector<8x128xf32>
    %c0_5 = arith.constant 0 : index
    %c0_6 = arith.constant 0 : index
    %8 = vector.load %arg7[%c0_5, %c0_6] : memref<8x128xf32, #tpu.memory_space<vmem>>, vector<8x128xf32>
    %c0_7 = arith.constant 0 : index
    %c0_8 = arith.constant 0 : index
    %9 = vector.load %arg4[%c0_7, %c0_8] : memref<128x128xf32, #tpu.memory_space<vmem>>, vector<128x128xf32>
    %cst_9 = arith.constant dense<0.000000e+00> : vector<8x128xf32>
    %10 = tpu.matmul %7, %9, %cst_9 {dimension_numbers = #tpu.dot_dimension_numbers<[1], [0], [0], [1], [0, 0, 1, 1], [], []>} : vector<8x128xf32>, vector<128x128xf32>, vector<8x128xf32> -> vector<8x128xf32>
    %11 = arith.addf %8, %10 : vector<8x128xf32>
    %c0_10 = arith.constant 0 : index
    %c0_11 = arith.constant 0 : index
    %12 = vector.load %arg7[%c0_10, %c0_11] : memref<8x128xf32, #tpu.memory_space<vmem>>, vector<8x128xf32>
    tpu.vector_store %arg7[%c0_10, %c0_11], %11 {strides = array<i32>} : memref<8x128xf32, #tpu.memory_space<vmem>>, vector<8x128xf32>,
    %c0_i32_12 = arith.constant 0 : i32
    %13 = arith.cmpi eq, %arg1, %c0_i32_12 : i32
    %14 = arith.extui %13 : i1 to i32
    %c0_i32_13 = arith.constant 0 : i32
    %15 = arith.cmpi ne, %14, %c0_i32_13 : i32
    scf.if %15 {
      %c0_14 = arith.constant 0 : index
      %c0_15 = arith.constant 0 : index
      %16 = vector.load %arg7[%c0_14, %c0_15] : memref<8x128xf32, #tpu.memory_space<vmem>>, vector<8x128xf32>
      %17 = arith.addf %16, %3 : vector<8x128xf32>
      %cst_16 = arith.constant dense<0.000000e+00> : vector<8xf32>
      %18 = vector.multi_reduction <add>, %17, %cst_16 [1] : vector<8x128xf32> to vector<8xf32>
      %19 = vector.shape_cast %18 : vector<8xf32> to vector<8x1xf32>
      %20 = arith.mulf %17, %17 : vector<8x128xf32>
      %cst_17 = arith.constant dense<0.000000e+00> : vector<8xf32>
      %21 = vector.multi_reduction <add>, %20, %cst_17 [1] : vector<8x128xf32> to vector<8xf32>
      %22 = vector.shape_cast %21 : vector<8xf32> to vector<8x1xf32>
      %cst_18 = arith.constant 3.125000e-02 : f32
      %23 = vector.broadcast %cst_18 : f32 to vector<8x1xf32>
      %24 = arith.mulf %19, %23 : vector<8x1xf32>
      %cst_19 = arith.constant 3.125000e-02 : f32
      %25 = vector.broadcast %cst_19 : f32 to vector<8x1xf32>
      %26 = arith.mulf %22, %25 : vector<8x1xf32>
      %27 = arith.mulf %24, %24 : vector<8x1xf32>
      %28 = arith.subf %26, %27 : vector<8x1xf32>
      %cst_20 = arith.constant 0.000000e+00 : f32
      %29 = vector.broadcast %cst_20 : f32 to vector<8x1xf32>
      %30 = arith.maximumf %28, %29 : vector<8x1xf32>
      %cst_21 = arith.constant 9.99999974E-6 : f32
      %31 = vector.broadcast %cst_21 : f32 to vector<8x1xf32>
      %32 = arith.addf %30, %31 : vector<8x1xf32>
      %33 = math.rsqrt %32 : vector<8x1xf32>
      %c0_22 = arith.constant 0 : index
      %c0_23 = arith.constant 0 : index
      %34 = vector.load %arg5[%c0_22, %c0_23] : memref<2x128xf32, #tpu.memory_space<vmem>>, vector<2x128xf32>
      %35 = vector.extract_strided_slice %34 {offsets = [0, 0], sizes = [1, 128], strides = [1, 1]} : vector<2x128xf32> to vector<1x128xf32>
      %36 = vector.extract_strided_slice %34 {offsets = [1, 0], sizes = [1, 128], strides = [1, 1]} : vector<2x128xf32> to vector<1x128xf32>
      %37 = vector.broadcast %24 : vector<8x1xf32> to vector<8x128xf32>
      %38 = arith.subf %17, %37 : vector<8x128xf32>
      %39 = vector.broadcast %33 : vector<8x1xf32> to vector<8x128xf32>
      %40 = arith.mulf %38, %39 : vector<8x128xf32>
      %41 = vector.broadcast %35 : vector<1x128xf32> to vector<8x128xf32>
      %42 = arith.mulf %40, %41 : vector<8x128xf32>
      %43 = vector.broadcast %36 : vector<1x128xf32> to vector<8x128xf32>
      %44 = arith.addf %42, %43 : vector<8x128xf32>
      %c0_24 = arith.constant 0 : index
      %c0_25 = arith.constant 0 : index
      %45 = vector.load %arg6[%c0_24, %c0_25] : memref<8x128xf32, #tpu.memory_space<vmem>>, vector<8x128xf32>
      tpu.vector_store %arg6[%c0_24, %c0_25], %44 {strides = array<i32>} : memref<8x128xf32, #tpu.memory_space<vmem>>, vector<8x128xf32>,
    } else {
    }
    return
  }
  func.func @transform_0(%arg0: i32, %arg1: i32) -> (i32, i32) {
    %c0_i32 = arith.constant 0 : i32
    %c0_i32_0 = arith.constant 0 : i32
    return %arg0, %c0_i32 : i32, i32
  }
  func.func @transform_1(%arg0: i32, %arg1: i32) -> (i32, i32) {
    %c0_i32 = arith.constant 0 : i32
    %c0_i32_0 = arith.constant 0 : i32
    return %c0_i32, %arg1 : i32, i32
  }
  func.func @transform_2(%arg0: i32, %arg1: i32) -> (i32, i32) {
    %c0_i32 = arith.constant 0 : i32
    %c0_i32_0 = arith.constant 0 : i32
    return %arg1, %c0_i32 : i32, i32
  }
  func.func @transform_3(%arg0: i32, %arg1: i32) -> (i32, i32) {
    %c0_i32 = arith.constant 0 : i32
    %c0_i32_0 = arith.constant 0 : i32
    %c0_i32_1 = arith.constant 0 : i32
    return %c0_i32, %c0_i32_0 : i32, i32
  }
  func.func @transform_4(%arg0: i32, %arg1: i32) -> (i32, i32) {
    %c0_i32 = arith.constant 0 : i32
    %c0_i32_0 = arith.constant 0 : i32
    return %arg0, %c0_i32 : i32, i32
  }
}

</mosaic_0001>

<llo_original>
// kernel: ffn.1
$region0: #{ffn.1}
  #allocation0 [shape = 'u32[]', space=smem, size = 0x4, offset = 0x4, fixed_abs, tag = 'smem constant byte address 0x4 - core index']
  #allocation1 [shape = 'u32[144,128]{1,0:T(1,128)}', space=vmem, size = 0x12000, scoped, tag = 'internal scratch']
  #allocation2 [shape = 'f32[8,128]{1,0:T(8,128)}', space=vmem, size = 0x1000, scoped, tag = 'scratch operand']
  %s0 = inlined_call_operand.vmem [shape: f32[16,128], index: 0, kind: input, shape index: {}]
  %s1 = inlined_call_operand.hbm [shape: f32[128,128], index: 1, kind: input, shape index: {}]
  %s2 = inlined_call_operand.hbm [shape: f32[128,128], index: 2, kind: input, shape index: {}]
  %s3 = inlined_call_operand.vmem [shape: f32[2,128], index: 3, kind: input, shape index: {}]
  %s4 = inlined_call_operand.vmem [shape: f32[16,128], index: 4, kind: output, shape index: {}]
  %s5 = sld [smem:[#allocation0]]
  $region65: #{ffn.1} parent=0
    _
  %s7 = ssub.s32 1, %s5
  %s8 = scalar_select 0, %s7, %s5
  $region1: #{ffn.1} parent=0
    #allocation3 [shape = 'u8[65536]{0}', space=vmem, size = 0x10000, scoped, tag = 'input window, operand 1, single buffered']
    #allocation4 [shape = 's32[2]{0}', space=sflag, size = 0x8, scoped, tag = 'scoped memory for ffn.1']
    #allocation5 [shape = 'u8[65536]{0}', space=vmem, size = 0x10000, scoped, tag = 'input window, operand 2, single buffered']
    #allocation6 [shape = 's32[1]{0}', space=sflag, size = 0x4, scoped, tag = 'scoped memory for ffn.1']
    %9 = vsyncpa [#allocation4], 0
    %10 = vsyncpa [#allocation6], 0
    loop: start=0, step=1, limit=4
    $region2: #{ffn.1} parent=1 // loop_pre_header
      _
    $region3: #{ffn.1} parent=1 // loop_header
      %s12 = sphi 0, %s16
      %p13 = scmp.ge.s32.totalorder %s12, 4
      %s19 = sphi 0, %s31
      %s20 = sphi 0, %s27
      %s21 = sphi 0, %s19
      %s22 = sphi 0, %s20
      %s23 = sphi 0, %s21
      %s24 = sphi 0, %s22
      %s34 = sphi 0, %s36
      %s37 = sphi 0, %s34
      %s38 = sphi 0, %s37
      %s54 = sphi 0, %s38
      %s60 = sphi 0, %s62
      %s63 = sphi 0, %s60
      %s64 = sphi 0, %s63
      %s80 = sphi 0, %s64
      %s86 = sphi 0, %s88
      %s89 = sphi 0, %s86
      %s90 = sphi 0, %s89
      %s106 = sphi 0, %s90
      %s110 = sphi 0, %s110
      %s112 = sphi 0, %s110
      %s113 = sphi 0, %s112
      %s127 = sphi 0, %s113
      %s133 = sphi 0, %s135
      %s136 = sphi 0, %s133
      %s137 = sphi 0, %s136
      %s153 = sphi 0, %s137
    $region4: #{ffn.1} parent=1 // loop_header_branch
      %15 = sbr.rel (%p13) target = $region8
    $region5: #{ffn.1} parent=1 // loop_body
      %s17 = ssub.s32 %s12, 1
      %s18 = ssub.s32 %s12, 2
      %s25 = sadd.s32 1, %s20
      %p26 = scmp.ge.s32.totalorder %s25, 1
      %s27 = scalar_select %p26, 0, %s25
      %s28 = sadd.s32 1, %s19
      %s29 = scalar_select %p26, %s28, %s19
      %p30 = scmp.ge.s32.totalorder %s29, 2
      %s31 = scalar_select %p30, 0, %s29
      %s32 = ssub.s32 %s19, %s31
      %p33 = scmp.eq.s32.totalorder %s32, 0
      %s35 = sadd.s32 %s34, 1
      %s36 = scalar_select %p33, %s34, %s35
      %p39 = pneg %p33
      %p40 = scmp.eq.s32.totalorder %s12, 1
      %p41 = por %p39, %p40
      %p42 = scmp.ne.s32.totalorder %s34, %s37
      %p43 = scmp.eq.s32.totalorder %s12, 0
      %p44 = por %p42, %p43
      %p45 = scmp.ne.s32.totalorder %s34, %s37
      %p46 = scmp.eq.s32.totalorder %s17, 1
      %p47 = por %p45, %p46
      %p48 = scmp.ne.s32.totalorder %s37, %s38
      %p49 = scmp.eq.s32.totalorder %s17, 0
      %p50 = por %p48, %p49
      %p51 = scmp.ne.s32.totalorder %s37, %s38
      %p52 = scmp.eq.s32.totalorder %s18, 1
      %p53 = por %p51, %p52
      %p55 = scmp.ne.s32.totalorder %s38, %s54
      %p56 = scmp.eq.s32.totalorder %s18, 0
      %p57 = por %p55, %p56
      %s58 = ssub.s32 %s20, %s27
      %p59 = scmp.eq.s32.totalorder %s58, 0
      %s61 = sadd.s32 %s60, 1
      %s62 = scalar_select %p59, %s60, %s61
      %p65 = pneg %p59
      %p66 = scmp.eq.s32.totalorder %s12, 1
      %p67 = por %p65, %p66
      %p68 = scmp.ne.s32.totalorder %s60, %s63
      %p69 = scmp.eq.s32.totalorder %s12, 0
      %p70 = por %p68, %p69
      %p71 = scmp.ne.s32.totalorder %s60, %s63
      %p72 = scmp.eq.s32.totalorder %s17, 1
      %p73 = por %p71, %p72
      %p74 = scmp.ne.s32.totalorder %s63, %s64
      %p75 = scmp.eq.s32.totalorder %s17, 0
      %p76 = por %p74, %p75
      %p77 = scmp.ne.s32.totalorder %s63, %s64
      %p78 = scmp.eq.s32.totalorder %s18, 1
      %p79 = por %p77, %p78
      %p81 = scmp.ne.s32.totalorder %s64, %s80
      %p82 = scmp.eq.s32.totalorder %s18, 0
      %p83 = por %p81, %p82
      %s84 = ssub.s32 %s20, %s27
      %p85 = scmp.eq.s32.totalorder %s84, 0
      %s87 = sadd.s32 %s86, 1
      %s88 = scalar_select %p85, %s86, %s87
      %p91 = pneg %p85
      %p92 = scmp.eq.s32.totalorder %s12, 1
      %p93 = por %p91, %p92
      %p94 = scmp.ne.s32.totalorder %s86, %s89
      %p95 = scmp.eq.s32.totalorder %s12, 0
      %p96 = por %p94, %p95
      %p97 = scmp.ne.s32.totalorder %s86, %s89
      %p98 = scmp.eq.s32.totalorder %s17, 1
      %p99 = por %p97, %p98
      %p100 = scmp.ne.s32.totalorder %s89, %s90
      %p101 = scmp.eq.s32.totalorder %s17, 0
      %p102 = por %p100, %p101
      %p103 = scmp.ne.s32.totalorder %s89, %s90
      %p104 = scmp.eq.s32.totalorder %s18, 1
      %p105 = por %p103, %p104
      %p107 = scmp.ne.s32.totalorder %s90, %s106
      %p108 = scmp.eq.s32.totalorder %s18, 0
      %p109 = por %p107, %p108
      %s111 = sadd.s32 %s110, 1
      %p114 = scmp.eq.s32.totalorder %s12, 1
      %p115 = scmp.ne.s32.totalorder %s110, %s112
      %p116 = scmp.eq.s32.totalorder %s12, 0
      %p117 = por %p115, %p116
      %p118 = scmp.ne.s32.totalorder %s110, %s112
      %p119 = scmp.eq.s32.totalorder %s17, 1
      %p120 = por %p118, %p119
      %p121 = scmp.ne.s32.totalorder %s112, %s113
      %p122 = scmp.eq.s32.totalorder %s17, 0
      %p123 = por %p121, %p122
      %p124 = scmp.ne.s32.totalorder %s112, %s113
      %p125 = scmp.eq.s32.totalorder %s18, 1
      %p126 = por %p124, %p125
      %p128 = scmp.ne.s32.totalorder %s113, %s127
      %p129 = scmp.eq.s32.totalorder %s18, 0
      %p130 = por %p128, %p129
      %s131 = ssub.s32 %s19, %s31
      %p132 = scmp.eq.s32.totalorder %s131, 0
      %s134 = sadd.s32 %s133, 1
      %s135 = scalar_select %p132, %s133, %s134
      %p138 = pneg %p132
      %p139 = scmp.eq.s32.totalorder %s12, 1
      %p140 = por %p138, %p139
      %p141 = scmp.ne.s32.totalorder %s133, %s136
      %p142 = scmp.eq.s32.totalorder %s12, 0
      %p143 = por %p141, %p142
      %p144 = scmp.ne.s32.totalorder %s133, %s136
      %p145 = scmp.eq.s32.totalorder %s17, 1
      %p146 = por %p144, %p145
      %p147 = scmp.ne.s32.totalorder %s136, %s137
      %p148 = scmp.eq.s32.totalorder %s17, 0
      %p149 = por %p147, %p148
      %p150 = scmp.ne.s32.totalorder %s136, %s137
      %p151 = scmp.eq.s32.totalorder %s18, 1
      %p152 = por %p150, %p151
      %p154 = scmp.ne.s32.totalorder %s137, %s153
      %p155 = scmp.eq.s32.totalorder %s18, 0
      %p156 = por %p154, %p155
      %p157 = scmp.le.s32.totalorder 1, %s12
      %p158 = scmp.lt.s32.totalorder %s12, 3
      %p159 = pnand %p157, %p158
      %p160 = pneg %p159
      // Predicated region
      $region9: #{ffn.1} parent=5 // pred_check
        _
      $region10: #{ffn.1} parent=5 // pred_check_branch
        %162 = sbr.rel (%p159) target = $region12
      $region11: #{ffn.1} parent=5 // pred_region
        %s163 = ssub.s32 %s12, 1
        // Predicated region
        $region13: #{ffn.1} parent=11 // pred_check
          %p164 = pneg %p76
        $region14: #{ffn.1} parent=11 // pred_check_branch
          %166 = sbr.rel (%p164) target = $region16
        $region15: #{ffn.1} parent=11 // pred_region
          %s168 = ssub.s32 2048, 2048
          %169 = vsyncadd [#allocation4], %s168
          %s170 = smul.addr %s22, 128
          %s171 = scalar_lea.hbm %s1, %s170
          %s172 = sshll.u32 [#allocation3], 4
          %s173 = int_to_ptr.vmem [resolvable:$true] %s172
          %178 = dma.hbm_to_vmem [thread:$0]  %s171, 2048, %s173, [#allocation4], 128, 128, 8
        $region16: #{ffn.1} parent=11 // pred_fallthru
          _
        // Predicated region
        $region17: #{ffn.1} parent=11 // pred_check
          %p179 = pneg %p102
        $region18: #{ffn.1} parent=11 // pred_check_branch
          %181 = sbr.rel (%p179) target = $region20
        $region19: #{ffn.1} parent=11 // pred_region
          %s182 = smul.u32 16, %s22
          %s184 = ssub.s32 2048, 2048
          %185 = vsyncadd [#allocation6], %s184
          %s186 = smul.addr %s182, 128
          %s187 = scalar_lea.hbm %s2, %s186
          %s188 = sshll.u32 [#allocation5], 4
          %s189 = int_to_ptr.vmem [resolvable:$true] %s188
          %194 = dma.hbm_to_vmem [thread:$0]  %s187, 2048, %s189, [#allocation6], 128, 128, 8
        $region20: #{ffn.1} parent=11 // pred_fallthru
          _
        // Predicated region
        $region21: #{ffn.1} parent=11 // pred_check
          %p195 = pneg %p123
        $region22: #{ffn.1} parent=11 // pred_check_branch
          %197 = sbr.rel (%p195) target = $region24
        $region23: #{ffn.1} parent=11 // pred_region
          _
        $region24: #{ffn.1} parent=11 // pred_fallthru
          _
      $region12: #{ffn.1} parent=5 // pred_fallthru
        _
      %p198 = scmp.lt.s32.totalorder %s12, 2
      // Predicated region
      $region25: #{ffn.1} parent=5 // pred_check
        %p199 = pneg %p198
      $region26: #{ffn.1} parent=5 // pred_check_branch
        %201 = sbr.rel (%p199) target = $region28
      $region27: #{ffn.1} parent=5 // pred_region
        // Predicated region
        $region29: #{ffn.1} parent=27 // pred_check
          %p202 = pneg %p44
        $region30: #{ffn.1} parent=27 // pred_check_branch
          %204 = sbr.rel (%p202) target = $region32
        $region31: #{ffn.1} parent=27 // pred_region
          %p205 = scmp.lt.s32.totalorder %s19, 1
          %s206 = scalar_select %p205, %s19, 1
          %s207 = smul.addr %s206, 8
          %s208 = scalar_lea.vmem %s0, %s207
        $region32: #{ffn.1} parent=27 // pred_fallthru
          _
      $region28: #{ffn.1} parent=5 // pred_fallthru
        _
      %p209 = scmp.le.s32.totalorder 1, %s12
      %p210 = scmp.lt.s32.totalorder %s12, 3
      %p211 = pnand %p209, %p210
      %p212 = pneg %p211
      // Predicated region
      $region33: #{ffn.1} parent=5 // pred_check
        _
      $region34: #{ffn.1} parent=5 // pred_check_branch
        %214 = sbr.rel (%p211) target = $region36
      $region35: #{ffn.1} parent=5 // pred_region
        %s215 = ssub.s32 %s12, 1
        // Predicated region
        $region37: #{ffn.1} parent=35 // pred_check
          %p216 = pneg %p76
        $region38: #{ffn.1} parent=35 // pred_check_branch
          %218 = sbr.rel (%p216) target = $region40
        $region39: #{ffn.1} parent=35 // pred_region
          %219 = dma.done [#allocation4], 2048
        $region40: #{ffn.1} parent=35 // pred_fallthru
          _
        // Predicated region
        $region41: #{ffn.1} parent=35 // pred_check
          %p220 = pneg %p102
        $region42: #{ffn.1} parent=35 // pred_check_branch
          %222 = sbr.rel (%p220) target = $region44
        $region43: #{ffn.1} parent=35 // pred_region
          %223 = dma.done [#allocation6], 2048
        $region44: #{ffn.1} parent=35 // pred_fallthru
          _
        %p224 = scmp.lt.s32.totalorder %s21, 1
        %s225 = scalar_select %p224, %s21, 1
        %s226 = smul.addr %s225, 8
        %s227 = scalar_lea.vmem %s0, %s226
        %p228 = pneg %p50
        %p229 = pneg %p47
        %p230 = pneg %p76
        %p231 = pneg %p73
        %p232 = pneg %p102
        %p233 = pneg %p99
        %p234 = pneg %p123
        %p235 = pneg %p120
        %p236 = pneg %p149
        %p237 = pneg %p146
        %p238 = scmp.lt.s32.totalorder %s21, 1
        %s239 = scalar_select %p238, %s21, 1
        %s240 = smul.addr %s239, 8
        %s241 = scalar_lea.vmem %s4, %s240
        %p242 = scmp.lt.s32.totalorder %s21, 1
        %s243 = scalar_select %p242, %s21, 1
        %s244 = smul.addr %s243, 8
        %s245 = scalar_lea.vmem %s0, %s244
        %s246 = smul.u32 16, %s22
        %p247 = scmp.lt.s32.totalorder %s21, 1
        %s248 = scalar_select %p247, %s21, 1
        %s249 = smul.addr %s248, 8
        %s250 = scalar_lea.vmem %s4, %s249
        %p251 = scmp.eq.s32.totalorder %s22, 0
        // Predicated region
        $region45: #{ffn.1} parent=35 // pred_check
          %p252 = pneg %p251
        $region46: #{ffn.1} parent=35 // pred_check_branch
          %254 = sbr.rel (%p252) target = $region48
        $region47: #{ffn.1} parent=35 // pred_region
          %255 = vst [vmem:[#allocation2] sm:$0xff] 0.0
        $region48: #{ffn.1} parent=35 // pred_fallthru
          _
        %v256 = vld [vmem:[%s245] sm:$0xff]
        %v257 = vld [vmem:[#allocation3] sm:$0xff]
        %v258 = vld [vmem:[#allocation3 + $0x8] sm:$0xff]
        %v259 = vld [vmem:[#allocation3 + $0x10] sm:$0xff]
        %v260 = vld [vmem:[#allocation3 + $0x18] sm:$0xff]
        %v261 = vld [vmem:[#allocation3 + $0x20] sm:$0xff]
        %v262 = vld [vmem:[#allocation3 + $0x28] sm:$0xff]
        %v263 = vld [vmem:[#allocation3 + $0x30] sm:$0xff]
        %v264 = vld [vmem:[#allocation3 + $0x38] sm:$0xff]
        %v265 = vld [vmem:[#allocation3 + $0x40] sm:$0xff]
        %v266 = vld [vmem:[#allocation3 + $0x48] sm:$0xff]
        %v267 = vld [vmem:[#allocation3 + $0x50] sm:$0xff]
        %v268 = vld [vmem:[#allocation3 + $0x58] sm:$0xff]
        %v269 = vld [vmem:[#allocation3 + $0x60] sm:$0xff]
        %v270 = vld [vmem:[#allocation3 + $0x68] sm:$0xff]
        %v271 = vld [vmem:[#allocation3 + $0x70] sm:$0xff]
        %v272 = vld [vmem:[#allocation3 + $0x78] sm:$0xff]
        %273 = vmatprep.subr.mxu0 0.0
        %274 = vmatpush1.msra.mxu0 %v257
        %275 = vmatprep.subr.mxu0 0.0
        %276 = vmatpush1.msra.mxu0 %v258
        %277 = vmatprep.subr.mxu0 0.0
        %278 = vmatpush1.msra.mxu0 %v259
        %279 = vmatprep.subr.mxu0 0.0
        %280 = vmatpush1.msra.mxu0 %v260
        %281 = vmatprep.subr.mxu0 0.0
        %282 = vmatpush1.msra.mxu0 %v261
        %283 = vmatprep.subr.mxu0 0.0
        %284 = vmatpush1.msra.mxu0 %v262
        %285 = vmatprep.subr.mxu0 0.0
        %286 = vmatpush1.msra.mxu0 %v263
        %287 = vmatprep.subr.mxu0 0.0
        %288 = vmatpush1.msra.mxu0 %v264
        %289 = vmatprep.subr.mxu0 0.0
        %290 = vmatpush1.msra.mxu0 %v265
        %291 = vmatprep.subr.mxu0 0.0
        %292 = vmatpush1.msra.mxu0 %v266
        %293 = vmatprep.subr.mxu0 0.0
        %294 = vmatpush1.msra.mxu0 %v267
        %295 = vmatprep.subr.mxu0 0.0
        %296 = vmatpush1.msra.mxu0 %v268
        %297 = vmatprep.subr.mxu0 0.0
        %298 = vmatpush1.msra.mxu0 %v269
        %299 = vmatprep.subr.mxu0 0.0
        %300 = vmatpush1.msra.mxu0 %v270
        %301 = vmatprep.subr.mxu0 0.0
        %302 = vmatpush1.msra.mxu0 %v271
        %303 = vmatprep.subr.mxu0 0.0
        %304 = vmatpush1.msra.mxu0 %v272
        %305 = vmatprep.subr.mxu0 0.0
        %306 = vmatpush1.msra.mxu0 0.0
        %307 = vmatprep.subr.mxu0 0.0
        %308 = vmatpush1.msra.mxu0 0.0
        %309 = vmatprep.subr.mxu0 0.0
        %310 = vmatpush1.msra.mxu0 0.0
        %311 = vmatprep.subr.mxu0 0.0
        %312 = vmatpush1.msra.mxu0 0.0
        %313 = vmatprep.subr.mxu0 0.0
        %314 = vmatpush1.msra.mxu0 0.0
        %315 = vmatprep.subr.mxu0 0.0
        %316 = vmatpush1.msra.mxu0 0.0
        %317 = vmatprep.subr.mxu0 0.0
        %318 = vmatpush1.msra.mxu0 0.0
        %319 = vmatprep.subr.mxu0 0.0
        %320 = vmatpush1.msra.mxu0 0.0
        %321 = vmatprep.subr.mxu0 0.0
        %322 = vmatpush1.msra.mxu0 0.0
        %323 = vmatprep.subr.mxu0 0.0
        %324 = vmatpush1.msra.mxu0 0.0
        %325 = vmatprep.subr.mxu0 0.0
        %326 = vmatpush1.msra.mxu0 0.0
        %327 = vmatprep.subr.mxu0 0.0
        %328 = vmatpush1.msra.mxu0 0.0
        %329 = vmatprep.subr.mxu0 0.0
        %330 = vmatpush1.msra.mxu0 0.0
        %331 = vmatprep.subr.mxu0 0.0
        %332 = vmatpush1.msra.mxu0 0.0
        %333 = vmatprep.subr.mxu0 0.0
        %334 = vmatpush1.msra.mxu0 0.0
        %335 = vmatprep.subr.mxu0 0.0
        %336 = vmatpush1.msra.mxu0 0.0
        %337 = vmatprep.mubr.f32.mxu0 0.0
        %338 = vmatmul.mubr.f32.gmra.mrb[0].mxu0 %v256
        %v339 = vpop.f32.mrb[0].mxu0
        %v340 = vadd.f32 0.0, %v339
        %v341 = vpop.f32.mrb[0].mxu0
        %342 = vdwg.mxu0
        %v343 = vmax.f32 %v340, 0.0
        %v344 = vld [vmem:[#allocation2] sm:$0xff]
        %v345 = vld [vmem:[#allocation5] sm:$0xff]
        %v346 = vld [vmem:[#allocation5 + $0x8] sm:$0xff]
        %v347 = vld [vmem:[#allocation5 + $0x10] sm:$0xff]
        %v348 = vld [vmem:[#allocation5 + $0x18] sm:$0xff]
        %v349 = vld [vmem:[#allocation5 + $0x20] sm:$0xff]
        %v350 = vld [vmem:[#allocation5 + $0x28] sm:$0xff]
        %v351 = vld [vmem:[#allocation5 + $0x30] sm:$0xff]
        %v352 = vld [vmem:[#allocation5 + $0x38] sm:$0xff]
        %v353 = vld [vmem:[#allocation5 + $0x40] sm:$0xff]
        %v354 = vld [vmem:[#allocation5 + $0x48] sm:$0xff]
        %v355 = vld [vmem:[#allocation5 + $0x50] sm:$0xff]
        %v356 = vld [vmem:[#allocation5 + $0x58] sm:$0xff]
        %v357 = vld [vmem:[#allocation5 + $0x60] sm:$0xff]
        %v358 = vld [vmem:[#allocation5 + $0x68] sm:$0xff]
        %v359 = vld [vmem:[#allocation5 + $0x70] sm:$0xff]
        %v360 = vld [vmem:[#allocation5 + $0x78] sm:$0xff]
        %361 = vmatprep.subr.mxu0 0.0
        %362 = vmatpush1.msra.mxu0 %v345
        %363 = vmatprep.subr.mxu0 0.0
        %364 = vmatpush1.msra.mxu0 %v346
        %365 = vmatprep.subr.mxu0 0.0
        %366 = vmatpush1.msra.mxu0 %v347
        %367 = vmatprep.subr.mxu0 0.0
        %368 = vmatpush1.msra.mxu0 %v348
        %369 = vmatprep.subr.mxu0 0.0
        %370 = vmatpush1.msra.mxu0 %v349
        %371 = vmatprep.subr.mxu0 0.0
        %372 = vmatpush1.msra.mxu0 %v350
        %373 = vmatprep.subr.mxu0 0.0
        %374 = vmatpush1.msra.mxu0 %v351
        %375 = vmatprep.subr.mxu0 0.0
        %376 = vmatpush1.msra.mxu0 %v352
        %377 = vmatprep.subr.mxu0 0.0
        %378 = vmatpush1.msra.mxu0 %v353
        %379 = vmatprep.subr.mxu0 0.0
        %380 = vmatpush1.msra.mxu0 %v354
        %381 = vmatprep.subr.mxu0 0.0
        %382 = vmatpush1.msra.mxu0 %v355
        %383 = vmatprep.subr.mxu0 0.0
        %384 = vmatpush1.msra.mxu0 %v356
        %385 = vmatprep.subr.mxu0 0.0
        %386 = vmatpush1.msra.mxu0 %v357
        %387 = vmatprep.subr.mxu0 0.0
        %388 = vmatpush1.msra.mxu0 %v358
        %389 = vmatprep.subr.mxu0 0.0
        %390 = vmatpush1.msra.mxu0 %v359
        %391 = vmatprep.subr.mxu0 0.0
        %392 = vmatpush1.msra.mxu0 %v360
        %393 = vmatprep.subr.mxu0 0.0
        %394 = vmatpush1.msra.mxu0 0.0
        %395 = vmatprep.subr.mxu0 0.0
        %396 = vmatpush1.msra.mxu0 0.0
        %397 = vmatprep.subr.mxu0 0.0
        %398 = vmatpush1.msra.mxu0 0.0
        %399 = vmatprep.subr.mxu0 0.0
        %400 = vmatpush1.msra.mxu0 0.0
        %401 = vmatprep.subr.mxu0 0.0
        %402 = vmatpush1.msra.mxu0 0.0
        %403 = vmatprep.subr.mxu0 0.0
        %404 = vmatpush1.msra.mxu0 0.0
        %405 = vmatprep.subr.mxu0 0.0
        %406 = vmatpush1.msra.mxu0 0.0
        %407 = vmatprep.subr.mxu0 0.0
        %408 = vmatpush1.msra.mxu0 0.0
        %409 = vmatprep.subr.mxu0 0.0
        %410 = vmatpush1.msra.mxu0 0.0
        %411 = vmatprep.subr.mxu0 0.0
        %412 = vmatpush1.msra.mxu0 0.0
        %413 = vmatprep.subr.mxu0 0.0
        %414 = vmatpush1.msra.mxu0 0.0
        %415 = vmatprep.subr.mxu0 0.0
        %416 = vmatpush1.msra.mxu0 0.0
        %417 = vmatprep.subr.mxu0 0.0
        %418 = vmatpush1.msra.mxu0 0.0
        %419 = vmatprep.subr.mxu0 0.0
        %420 = vmatpush1.msra.mxu0 0.0
        %421 = vmatprep.subr.mxu0 0.0
        %422 = vmatpush1.msra.mxu0 0.0
        %423 = vmatprep.subr.mxu0 0.0
        %424 = vmatpush1.msra.mxu0 0.0
        %425 = vmatprep.mubr.f32.mxu0 0.0
        %426 = vmatmul.mubr.f32.gmra.mrb[0].mxu0 %v343
        %v427 = vpop.f32.mrb[0].mxu0
        %v428 = vadd.f32 0.0, %v427
        %v429 = vpop.f32.mrb[0].mxu0
        %430 = vdwg.mxu0
        %v431 = vadd.f32 %v344, %v428
        %432 = vst [vmem:[#allocation2] sm:$0xff] %v431
        // Predicated region
        $region49: #{ffn.1} parent=35 // pred_check
          %p433 = pneg %p251
        $region50: #{ffn.1} parent=35 // pred_check_branch
          %435 = sbr.rel (%p433) target = $region52
        $region51: #{ffn.1} parent=35 // pred_region
          %v436 = vld [vmem:[#allocation2] sm:$0xff]
          %v437 = vadd.f32 %v436, %v256
          %438 = vadd.xlane.f32.xlu0 %v437
          %v439 = vpop.xlane.xlu0 %438
          %v440 = vmul.f32 %v437, %v437
          %441 = vadd.xlane.f32.xlu0 %v440
          %v442 = vpop.xlane.xlu0 %441
          %v443 = vmul.f32 %v439, 0.03125
          %v444 = vmul.f32 %v442, 0.03125
          %v445 = vmul.f32 %v443, %v443
          %v446 = vsub.f32 %v444, %v445
          %v447 = vmax.f32 %v446, 0.0
          %v448 = vadd.f32 %v447, 1e-05
          %v449 = vrsqrt.pop %v448
          %v450 = vld [vmem:[%s3] sm:$0x3]
          %v451 = vsub.f32 %v437, %v443
          %v452 = vmul.f32 %v451, %v449
          %v453 = vlaneseq
          %v454 = vshrl.u32 %v453, 7
          %v455 = vsub.s32 0, %v454
          %v456 = vrot.slane %v450, %v455
          %v457 = vmul.f32 %v452, %v456
          %v458 = vlaneseq
          %v459 = vshrl.u32 %v458, 7
          %v460 = vsub.s32 1, %v459
          %v461 = vrot.slane %v450, %v460
          %v462 = vadd.f32 %v457, %v461
          %463 = vst [vmem:[%s250] sm:$0xff] %v462
        $region52: #{ffn.1} parent=35 // pred_fallthru
          _
        %p464 = scmp.lt.s32.totalorder %s21, 1
        %s465 = scalar_select %p464, %s21, 1
        %s466 = smul.addr %s465, 8
        %s467 = scalar_lea.vmem %s4, %s466
        // Predicated region
        $region53: #{ffn.1} parent=35 // pred_check
          %p468 = pneg %p146
        $region54: #{ffn.1} parent=35 // pred_check_branch
          %470 = sbr.rel (%p468) target = $region56
        $region55: #{ffn.1} parent=35 // pred_region
          _
        $region56: #{ffn.1} parent=35 // pred_fallthru
          _
      $region36: #{ffn.1} parent=5 // pred_fallthru
        _
      %p471 = scmp.le.s32.totalorder 2, %s12
      // Predicated region
      $region57: #{ffn.1} parent=5 // pred_check
        %p472 = pneg %p471
      $region58: #{ffn.1} parent=5 // pred_check_branch
        %474 = sbr.rel (%p472) target = $region60
      $region59: #{ffn.1} parent=5 // pred_region
        %s475 = ssub.s32 %s12, 2
        // Predicated region
        $region61: #{ffn.1} parent=59 // pred_check
          %p476 = pneg %p152
        $region62: #{ffn.1} parent=59 // pred_check_branch
          %478 = sbr.rel (%p476) target = $region64
        $region63: #{ffn.1} parent=59 // pred_region
          %p479 = scmp.lt.s32.totalorder %s23, 1
          %s480 = scalar_select %p479, %s23, 1
          %s481 = smul.addr %s480, 8
          %s482 = scalar_lea.vmem %s4, %s481
        $region64: #{ffn.1} parent=59 // pred_fallthru
          _
      $region60: #{ffn.1} parent=5 // pred_fallthru
        _
    $region6: #{ffn.1} parent=1 // loop_footer
      %s16 = sadd.s32 1, %s12
    $region7: #{ffn.1} parent=1 // loop_footer_branch
      %11 = sbr.rel target = $region3
    $region8: #{ffn.1} parent=1 // loop_exit
      _
    %483 = vsyncpa [#allocation4], 1
    %s484 = scalar_lea.sflag [#allocation4], 1
    %485 = vsyncpa %s484, 1
    %486 = vsyncpa [#allocation6], 1

</llo_original>
